<compile_context>
chip_gen: v6e
topology: v6e:2x2x1
jax: 0.10.0
libtpu: 0.0.40
codegen_flags: <defaults>
</compile_context>

<pallas_src>
import jax
import jax.numpy as jnp
from jax.experimental import pallas as pl
from jax.experimental.pallas import tpu as pltpu


def _round_up(n: int, m: int) -> int:
    return ((n + m - 1) // m) * m


def mlp_kernel(x_ref, w1_ref, w2_ref, o_ref):
    # fc1: [B, F_in_p](bf16) @ [F_in_p, H](bf16) -> [B, H] f32 accumulate.
    h = jnp.dot(x_ref[...], w1_ref[...], preferred_element_type=jnp.float32)
    # ReLU in f32 (portable across v5e/v6e/v7x).
    h = jnp.maximum(h, 0.0)
    # fc2: bf16 activations into the MXU, f32 accumulation, masked store to
    # the narrow (B, exitus) output block.
    o_ref[...] = jnp.dot(h.astype(jnp.bfloat16), w2_ref[...],
                         preferred_element_type=jnp.float32).astype(o_ref.dtype)


def prepare_params(w1, w2):
    """One-time parameter prep (hoisted out of the per-call path).

    w1 : [256, initus]  float32  (PyTorch fcLayer01.weight)
    w2 : [exitus, 256]  float32  (PyTorch fcLayer02.weight)

    Returns bf16, transposed, F_in lane-padded weights ready for the kernel:
      w1_p : [F_in_p, 256] bf16   (F_in_p = round_up(initus, 128), zero pad)
      w2_p : [256, exitus] bf16   (no padding -- keeps w2 DMA at ~5 KB)
    """
    H, F_in = w1.shape
    F_in_p = _round_up(F_in, 128)
    w1_p = jnp.pad(w1.T, ((0, F_in_p - F_in), (0, 0))).astype(jnp.bfloat16)
    w2_p = w2.T.astype(jnp.bfloat16)
    return w1_p, w2_p


@jax.jit
def classifier_mnist_fc(x, w1_p, w2_p):
    """Forward pass of classifierMNISTFC: relu(x @ W1^T) @ W2^T (no biases).

    x    : [B, initus]      float32 (unpadded; pad/cast is fused in this jit)
    w1_p : [F_in_p, 256]    bfloat16 (from prepare_params)
    w2_p : [256, exitus]    bfloat16 (from prepare_params)
    """
    B, F_in = x.shape
    F_in_p, H = w1_p.shape
    F_out = w2_p.shape[1]

    # Tiny pad+cast of x, fused into this jit alongside the pallas_call.
    x_p = jnp.pad(x, ((0, 0), (0, F_in_p - F_in))).astype(jnp.bfloat16)

    flops = 2 * B * (F_in_p * H + H * F_out)
    bytes_accessed = (x_p.size * 2 + w1_p.size * 2 + w2_p.size * 2
                      + B * F_out * 4)

    return pl.pallas_call(
        mlp_kernel,
        out_shape=jax.ShapeDtypeStruct((B, F_out), jnp.float32),
        grid_spec=pltpu.PrefetchScalarGridSpec(
            num_scalar_prefetch=0,
            grid=(1,),
            in_specs=[
                pl.BlockSpec((B, F_in_p), lambda i: (0, 0)),
                pl.BlockSpec((F_in_p, H), lambda i: (0, 0)),
                pl.BlockSpec((H, F_out), lambda i: (0, 0)),
            ],
            out_specs=pl.BlockSpec((B, F_out), lambda i: (0, 0)),
        ),
        compiler_params=pltpu.CompilerParams(
            dimension_semantics=("arbitrary",)),
        cost_estimate=pl.CostEstimate(
            flops=flops, transcendentals=0, bytes_accessed=bytes_accessed),
    )(x_p, w1_p, w2_p)


if __name__ == "__main__":
    # Small MNIST-like shapes: batch=8, initus=784 (28*28), exitus=10.
    B, INITUS, HIDDEN, EXITUS = 8, 784, 256, 10

    key = jax.random.PRNGKey(0)
    kx, k1, k2 = jax.random.split(key, 3)

    # Deterministic params mimicking torch.nn.Linear init:
    # U(-1/sqrt(fan_in), 1/sqrt(fan_in)).
    bound1 = 1.0 / (INITUS ** 0.5)
    bound2 = 1.0 / (HIDDEN ** 0.5)
    w1 = jax.random.uniform(k1, (HIDDEN, INITUS), jnp.float32, -bound1, bound1)  # fcLayer01.weight
    w2 = jax.random.uniform(k2, (EXITUS, HIDDEN), jnp.float32, -bound2, bound2)  # fcLayer02.weight

    x = jax.random.normal(kx, (B, INITUS), jnp.float32)

    # One-time weight prep (hoisted out of the inference call).
    w1_p, w2_p = prepare_params(w1, w2)
    w1_p, w2_p = jax.block_until_ready((w1_p, w2_p))

    out = classifier_mnist_fc(x, w1_p, w2_p)
    out = jax.block_until_ready(out)

    # Reference check in plain JAX f32 (same math as the PyTorch forward);
    # tolerance loosened for the bf16 MXU inputs (f32 accumulation).
    ref = jnp.maximum(x @ w1.T, 0.0) @ w2.T
    assert out.shape == (B, EXITUS)
    assert jnp.allclose(out, ref, atol=2e-2, rtol=2e-2), (
        float(jnp.max(jnp.abs(out - ref))))

    print("KERNEL_OK")
</pallas_src>

<mosaic_0001>
module attributes {stable_mosaic.version = 11 : i64} {
  func.func @mlp_kernel(%arg0: i32, %arg1: memref<8x896xbf16, #tpu.memory_space<vmem>>, %arg2: memref<896x256xbf16, #tpu.memory_space<vmem>>, %arg3: memref<256x10xbf16, #tpu.memory_space<vmem>>, %arg4: memref<8x10xf32, #tpu.memory_space<vmem>>) attributes {dimension_semantics = [#tpu.dimension_semantics<arbitrary>], iteration_bounds = array<i64: 1>, scalar_prefetch = 0 : i64, scratch_operands = 0 : i64, tpu.core_type = #tpu.core_type<tc>, window_params = [{pipeline_mode = #tpu.pipeline_mode<synchronous>, transform_indices = @transform_0, window_bounds = array<i64: 8, 896>}, {pipeline_mode = #tpu.pipeline_mode<synchronous>, transform_indices = @transform_1, window_bounds = array<i64: 896, 256>}, {pipeline_mode = #tpu.pipeline_mode<synchronous>, transform_indices = @transform_2, window_bounds = array<i64: 256, 10>}, {pipeline_mode = #tpu.pipeline_mode<synchronous>, transform_indices = @transform_3, window_bounds = array<i64: 8, 10>}]} {
    %c0 = arith.constant 0 : index
    %c0_0 = arith.constant 0 : index
    %0 = vector.load %arg1[%c0, %c0_0] : memref<8x896xbf16, #tpu.memory_space<vmem>>, vector<8x896xbf16>
    %c0_1 = arith.constant 0 : index
    %c0_2 = arith.constant 0 : index
    %1 = vector.load %arg2[%c0_1, %c0_2] : memref<896x256xbf16, #tpu.memory_space<vmem>>, vector<896x256xbf16>
    %cst = arith.constant dense<0.000000e+00> : vector<8x256xf32>
    %2 = tpu.matmul %0, %1, %cst {dimension_numbers = #tpu.dot_dimension_numbers<[1], [0], [0], [1], [0, 0, 1, 1], [], []>} : vector<8x896xbf16>, vector<896x256xbf16>, vector<8x256xf32> -> vector<8x256xf32>
    %cst_3 = arith.constant 0.000000e+00 : f32
    %3 = vector.broadcast %cst_3 : f32 to vector<8x256xf32>
    %4 = arith.maximumf %2, %3 : vector<8x256xf32>
    %5 = arith.truncf %4 : vector<8x256xf32> to vector<8x256xbf16>
    %c0_4 = arith.constant 0 : index
    %c0_5 = arith.constant 0 : index
    %6 = vector.load %arg3[%c0_4, %c0_5] : memref<256x10xbf16, #tpu.memory_space<vmem>>, vector<256x10xbf16>
    %cst_6 = arith.constant dense<0.000000e+00> : vector<8x10xf32>
    %7 = tpu.matmul %5, %6, %cst_6 {dimension_numbers = #tpu.dot_dimension_numbers<[1], [0], [0], [1], [0, 0, 1, 1], [], []>} : vector<8x256xbf16>, vector<256x10xbf16>, vector<8x10xf32> -> vector<8x10xf32>
    %c0_7 = arith.constant 0 : index
    %c0_8 = arith.constant 0 : index
    %8 = vector.load %arg4[%c0_7, %c0_8] : memref<8x10xf32, #tpu.memory_space<vmem>>, vector<8x10xf32>
    tpu.vector_store %arg4[%c0_7, %c0_8], %7 {strides = array<i32>} : memref<8x10xf32, #tpu.memory_space<vmem>>, vector<8x10xf32>,
    return
  }
  func.func @transform_0(%arg0: i32) -> (i32, i32) {
    %c0_i32 = arith.constant 0 : i32
    %c0_i32_0 = arith.constant 0 : i32
    %c0_i32_1 = arith.constant 0 : i32
    return %c0_i32, %c0_i32_0 : i32, i32
  }
  func.func @transform_1(%arg0: i32) -> (i32, i32) {
    %c0_i32 = arith.constant 0 : i32
    %c0_i32_0 = arith.constant 0 : i32
    %c0_i32_1 = arith.constant 0 : i32
    return %c0_i32, %c0_i32_0 : i32, i32
  }
  func.func @transform_2(%arg0: i32) -> (i32, i32) {
    %c0_i32 = arith.constant 0 : i32
    %c0_i32_0 = arith.constant 0 : i32
    %c0_i32_1 = arith.constant 0 : i32
    return %c0_i32, %c0_i32_0 : i32, i32
  }
  func.func @transform_3(%arg0: i32) -> (i32, i32) {
    %c0_i32 = arith.constant 0 : i32
    %c0_i32_0 = arith.constant 0 : i32
    %c0_i32_1 = arith.constant 0 : i32
    return %c0_i32, %c0_i32_0 : i32, i32
  }
}

</mosaic_0001>

<llo_original>
// kernel: classifier_mnist_fc.1
$region0: #{classifier_mnist_fc.1}
  #allocation0 [shape = 'u32[]', space=smem, size = 0x4, offset = 0x4, fixed_abs, tag = 'smem constant byte address 0x4 - core index']
  #allocation1 [shape = 'u32[144,128]{1,0:T(1,128)}', space=vmem, size = 0x12000, scoped, tag = 'internal scratch']
  %s0 = inlined_call_operand.vmem [shape: bf16[8,896], index: 0, kind: input, shape index: {}]
  %s1 = inlined_call_operand.hbm [shape: bf16[896,256], index: 1, kind: input, shape index: {}]
  %s2 = inlined_call_operand.vmem [shape: bf16[256,10], index: 2, kind: input, shape index: {}]
  %s3 = inlined_call_operand.hbm [shape: f32[8,10], index: 3, kind: output, shape index: {}]
  %s4 = sld [smem:[#allocation0]]
  $region26: #{classifier_mnist_fc.1} parent=0
    _
  %s6 = ssub.s32 1, %s4
  %s7 = scalar_select 0, %s6, %s4
  $region1: #{classifier_mnist_fc.1} parent=0
    #allocation2 [shape = 'u8[458752]{0}', space=vmem, size = 0x70000, scoped, tag = 'input window, operand 1, single buffered']
    #allocation3 [shape = 's32[1]{0}', space=sflag, size = 0x4, scoped, tag = 'scoped memory for classifier_mnist_fc.1']
    #allocation4 [shape = 's32[1]{0}', space=sflag, size = 0x4, scoped, tag = 'scoped memory for classifier_mnist_fc.1']
    #allocation5 [shape = 'u8[4096]{0}', space=vmem, size = 0x1000, scoped, tag = 'output window, operand 0, single buffered']
    %8 = vsyncpa [#allocation3], 0
    %9 = vsyncpa [#allocation4], 0
    // Predicated region
    $region2: #{classifier_mnist_fc.1} parent=1 // pred_check
      _
    $region3: #{classifier_mnist_fc.1} parent=1 // pred_check_branch
      %11 = sbr.rel (0) target = $region5
    $region4: #{classifier_mnist_fc.1} parent=1 // pred_region
      _
    $region5: #{classifier_mnist_fc.1} parent=1 // pred_fallthru
      _
    // Predicated region
    $region6: #{classifier_mnist_fc.1} parent=1 // pred_check
      _
    $region7: #{classifier_mnist_fc.1} parent=1 // pred_check_branch
      %13 = sbr.rel (0) target = $region9
    $region8: #{classifier_mnist_fc.1} parent=1 // pred_region
      %s15 = ssub.s32 14336, 14336
      %16 = vsyncadd [#allocation3], %s15
      %s17 = sshll.u32 [#allocation2], 4
      %s18 = int_to_ptr.vmem [resolvable:$true] %s17
      %23 = dma.hbm_to_vmem [thread:$0]  %s1, 14336, %s18, [#allocation3], 128, 128, 8
    $region9: #{classifier_mnist_fc.1} parent=1 // pred_fallthru
      _
    // Predicated region
    $region10: #{classifier_mnist_fc.1} parent=1 // pred_check
      _
    $region11: #{classifier_mnist_fc.1} parent=1 // pred_check_branch
      %25 = sbr.rel (0) target = $region13
    $region12: #{classifier_mnist_fc.1} parent=1 // pred_region
      _
    $region13: #{classifier_mnist_fc.1} parent=1 // pred_fallthru
      _
    // Predicated region
    $region14: #{classifier_mnist_fc.1} parent=1 // pred_check
      _
    $region15: #{classifier_mnist_fc.1} parent=1 // pred_check_branch
      %27 = sbr.rel (0) target = $region17
    $region16: #{classifier_mnist_fc.1} parent=1 // pred_region
      %28 = dma.done [#allocation3], 14336
    $region17: #{classifier_mnist_fc.1} parent=1 // pred_fallthru
      _
    %v30 = vld [vmem:[%s0] sm:$0xff]
    %v31 = vld [vmem:[%s0 + $0x8] sm:$0xff]
    %v32 = vld [vmem:[%s0 + $0x10] sm:$0xff]
    %v33 = vld [vmem:[%s0 + $0x18] sm:$0xf]
    %v34 = vld [vmem:[#allocation2] sm:$0xff]
    %v35 = vld [vmem:[#allocation2 + $0x8] sm:$0xff]
    %v36 = vld [vmem:[#allocation2 + $0x10] sm:$0xff]
    %v37 = vld [vmem:[#allocation2 + $0x18] sm:$0xff]
    %v38 = vld [vmem:[#allocation2 + $0x20] sm:$0xff]
    %v39 = vld [vmem:[#allocation2 + $0x28] sm:$0xff]
    %v40 = vld [vmem:[#allocation2 + $0x30] sm:$0xff]
    %v41 = vld [vmem:[#allocation2 + $0x38] sm:$0xff]
    %v42 = vld [vmem:[#allocation2 + $0x40] sm:$0xff]
    %v43 = vld [vmem:[#allocation2 + $0x48] sm:$0xff]
    %v44 = vld [vmem:[#allocation2 + $0x50] sm:$0xff]
    %v45 = vld [vmem:[#allocation2 + $0x58] sm:$0xff]
    %v46 = vld [vmem:[#allocation2 + $0x60] sm:$0xff]
    %v47 = vld [vmem:[#allocation2 + $0x68] sm:$0xff]
    %v48 = vld [vmem:[#allocation2 + $0x70] sm:$0xff]
    %v49 = vld [vmem:[#allocation2 + $0x78] sm:$0xff]
    %v50 = vld [vmem:[#allocation2 + $0x80] sm:$0xff]
    %v51 = vld [vmem:[#allocation2 + $0x88] sm:$0xff]
    %v52 = vld [vmem:[#allocation2 + $0x90] sm:$0xff]
    %v53 = vld [vmem:[#allocation2 + $0x98] sm:$0xff]
    %v54 = vld [vmem:[#allocation2 + $0xa0] sm:$0xff]
    %v55 = vld [vmem:[#allocation2 + $0xa8] sm:$0xff]
    %v56 = vld [vmem:[#allocation2 + $0xb0] sm:$0xff]
    %v57 = vld [vmem:[#allocation2 + $0xb8] sm:$0xff]
    %v58 = vld [vmem:[#allocation2 + $0xc0] sm:$0xff]
    %v59 = vld [vmem:[#allocation2 + $0xc8] sm:$0xff]
    %v60 = vld [vmem:[#allocation2 + $0xd0] sm:$0xff]
    %v61 = vld [vmem:[#allocation2 + $0xd8] sm:$0xff]
    %v62 = vld [vmem:[#allocation2 + $0xe0] sm:$0xff]
    %v63 = vld [vmem:[#allocation2 + $0xe8] sm:$0xff]
    %v64 = vld [vmem:[#allocation2 + $0xf0] sm:$0xff]
    %v65 = vld [vmem:[#allocation2 + $0xf8] sm:$0xff]
    %v66 = vld [vmem:[#allocation2 + $0x100] sm:$0xff]
    %v67 = vld [vmem:[#allocation2 + $0x108] sm:$0xff]
    %v68 = vld [vmem:[#allocation2 + $0x110] sm:$0xff]
    %v69 = vld [vmem:[#allocation2 + $0x118] sm:$0xff]
    %v70 = vld [vmem:[#allocation2 + $0x120] sm:$0xff]
    %v71 = vld [vmem:[#allocation2 + $0x128] sm:$0xff]
    %v72 = vld [vmem:[#allocation2 + $0x130] sm:$0xff]
    %v73 = vld [vmem:[#allocation2 + $0x138] sm:$0xff]
    %v74 = vld [vmem:[#allocation2 + $0x140] sm:$0xff]
    %v75 = vld [vmem:[#allocation2 + $0x148] sm:$0xff]
    %v76 = vld [vmem:[#allocation2 + $0x150] sm:$0xff]
    %v77 = vld [vmem:[#allocation2 + $0x158] sm:$0xff]
    %v78 = vld [vmem:[#allocation2 + $0x160] sm:$0xff]
    %v79 = vld [vmem:[#allocation2 + $0x168] sm:$0xff]
    %v80 = vld [vmem:[#allocation2 + $0x170] sm:$0xff]
    %v81 = vld [vmem:[#allocation2 + $0x178] sm:$0xff]
    %v82 = vld [vmem:[#allocation2 + $0x180] sm:$0xff]
    %v83 = vld [vmem:[#allocation2 + $0x188] sm:$0xff]
    %v84 = vld [vmem:[#allocation2 + $0x190] sm:$0xff]
    %v85 = vld [vmem:[#allocation2 + $0x198] sm:$0xff]
    %v86 = vld [vmem:[#allocation2 + $0x1a0] sm:$0xff]
    %v87 = vld [vmem:[#allocation2 + $0x1a8] sm:$0xff]
    %v88 = vld [vmem:[#allocation2 + $0x1b0] sm:$0xff]
    %v89 = vld [vmem:[#allocation2 + $0x1b8] sm:$0xff]
    %v90 = vld [vmem:[#allocation2 + $0x1c0] sm:$0xff]
    %v91 = vld [vmem:[#allocation2 + $0x1c8] sm:$0xff]
    %v92 = vld [vmem:[#allocation2 + $0x1d0] sm:$0xff]
    %v93 = vld [vmem:[#allocation2 + $0x1d8] sm:$0xff]
    %v94 = vld [vmem:[#allocation2 + $0x1e0] sm:$0xff]
    %v95 = vld [vmem:[#allocation2 + $0x1e8] sm:$0xff]
    %v96 = vld [vmem:[#allocation2 + $0x1f0] sm:$0xff]
    %v97 = vld [vmem:[#allocation2 + $0x1f8] sm:$0xff]
    %v98 = vld [vmem:[#allocation2 + $0x200] sm:$0xff]
    %v99 = vld [vmem:[#allocation2 + $0x208] sm:$0xff]
    %v100 = vld [vmem:[#allocation2 + $0x210] sm:$0xff]
    %v101 = vld [vmem:[#allocation2 + $0x218] sm:$0xff]
    %v102 = vld [vmem:[#allocation2 + $0x220] sm:$0xff]
    %v103 = vld [vmem:[#allocation2 + $0x228] sm:$0xff]
    %v104 = vld [vmem:[#allocation2 + $0x230] sm:$0xff]
    %v105 = vld [vmem:[#allocation2 + $0x238] sm:$0xff]
    %v106 = vld [vmem:[#allocation2 + $0x240] sm:$0xff]
    %v107 = vld [vmem:[#allocation2 + $0x248] sm:$0xff]
    %v108 = vld [vmem:[#allocation2 + $0x250] sm:$0xff]
    %v109 = vld [vmem:[#allocation2 + $0x258] sm:$0xff]
    %v110 = vld [vmem:[#allocation2 + $0x260] sm:$0xff]
    %v111 = vld [vmem:[#allocation2 + $0x268] sm:$0xff]
    %v112 = vld [vmem:[#allocation2 + $0x270] sm:$0xff]
    %v113 = vld [vmem:[#allocation2 + $0x278] sm:$0xff]
    %v114 = vld [vmem:[#allocation2 + $0x280] sm:$0xff]
    %v115 = vld [vmem:[#allocation2 + $0x288] sm:$0xff]
    %v116 = vld [vmem:[#allocation2 + $0x290] sm:$0xff]
    %v117 = vld [vmem:[#allocation2 + $0x298] sm:$0xff]
    %v118 = vld [vmem:[#allocation2 + $0x2a0] sm:$0xff]
    %v119 = vld [vmem:[#allocation2 + $0x2a8] sm:$0xff]
    %v120 = vld [vmem:[#allocation2 + $0x2b0] sm:$0xff]
    %v121 = vld [vmem:[#allocation2 + $0x2b8] sm:$0xff]
    %v122 = vld [vmem:[#allocation2 + $0x2c0] sm:$0xff]
    %v123 = vld [vmem:[#allocation2 + $0x2c8] sm:$0xff]
    %v124 = vld [vmem:[#allocation2 + $0x2d0] sm:$0xff]
    %v125 = vld [vmem:[#allocation2 + $0x2d8] sm:$0xff]
    %v126 = vld [vmem:[#allocation2 + $0x2e0] sm:$0xff]
    %v127 = vld [vmem:[#allocation2 + $0x2e8] sm:$0xff]
    %v128 = vld [vmem:[#allocation2 + $0x2f0] sm:$0xff]
    %v129 = vld [vmem:[#allocation2 + $0x2f8] sm:$0xff]
    %v130 = vld [vmem:[#allocation2 + $0x300] sm:$0xff]
    %v131 = vld [vmem:[#allocation2 + $0x308] sm:$0xff]
    %v132 = vld [vmem:[#allocation2 + $0x310] sm:$0xff]
    %v133 = vld [vmem:[#allocation2 + $0x318] sm:$0xff]
    %v134 = vld [vmem:[#allocation2 + $0x320] sm:$0xff]
    %v135 = vld [vmem:[#allocation2 + $0x328] sm:$0xff]
    %v136 = vld [vmem:[#allocation2 + $0x330] sm:$0xff]
    %v137 = vld [vmem:[#allocation2 + $0x338] sm:$0xff]
    %v138 = vld [vmem:[#allocation2 + $0x340] sm:$0xff]
    %v139 = vld [vmem:[#allocation2 + $0x348] sm:$0xff]
    %v140 = vld [vmem:[#allocation2 + $0x350] sm:$0xff]
    %v141 = vld [vmem:[#allocation2 + $0x358] sm:$0xff]
    %v142 = vld [vmem:[#allocation2 + $0x360] sm:$0xff]
    %v143 = vld [vmem:[#allocation2 + $0x368] sm:$0xff]
    %v144 = vld [vmem:[#allocation2 + $0x370] sm:$0xff]
    %v145 = vld [vmem:[#allocation2 + $0x378] sm:$0xff]
    %v150 = vunpack.c.l.b16 %v30
    %v151 = vunpack.c.h.b16 %v30
    %v152 = vunpack.c.l.b16 %v31
    %v153 = vunpack.c.h.b16 %v31
    %v154 = vunpack.c.l.b16 %v32
    %v155 = vunpack.c.h.b16 %v32
    %v156 = vunpack.c.l.b16 %v33
    %v157 = vpack.c.b16 %v150, %v150
    %v158 = vpack.c.b16 %v151, %v151
    %v159 = vpack.c.b16 %v152, %v152
    %v160 = vpack.c.b16 %v153, %v153
    %v161 = vpack.c.b16 %v154, %v154
    %v162 = vpack.c.b16 %v155, %v155
    %v163 = vpack.c.b16 %v156, %v156
    %v283 = vunpack.c.l.b16 %v34
    %v284 = vunpack.c.h.b16 %v34
    %v285 = vunpack.c.l.b16 %v35
    %v286 = vunpack.c.h.b16 %v35
    %v287 = vunpack.c.l.b16 %v36
    %v288 = vunpack.c.h.b16 %v36
    %v289 = vunpack.c.l.b16 %v37
    %v290 = vunpack.c.h.b16 %v37
    %v291 = vunpack.c.l.b16 %v38
    %v292 = vunpack.c.h.b16 %v38
    %v293 = vunpack.c.l.b16 %v39
    %v294 = vunpack.c.h.b16 %v39
    %v295 = vunpack.c.l.b16 %v40
    %v296 = vunpack.c.h.b16 %v40
    %v297 = vunpack.c.l.b16 %v41
    %v298 = vunpack.c.h.b16 %v41
    %v299 = vunpack.c.l.b16 %v42
    %v300 = vunpack.c.h.b16 %v42
    %v301 = vunpack.c.l.b16 %v43
    %v302 = vunpack.c.h.b16 %v43
    %v303 = vunpack.c.l.b16 %v44
    %v304 = vunpack.c.h.b16 %v44
    %v305 = vunpack.c.l.b16 %v45
    %v306 = vunpack.c.h.b16 %v45
    %v307 = vunpack.c.l.b16 %v46
    %v308 = vunpack.c.h.b16 %v46
    %v309 = vunpack.c.l.b16 %v47
    %v310 = vunpack.c.h.b16 %v47
    %v311 = vunpack.c.l.b16 %v48
    %v312 = vunpack.c.h.b16 %v48
    %v313 = vunpack.c.l.b16 %v49
    %v314 = vunpack.c.h.b16 %v49
    %v315 = vunpack.c.l.b16 %v50
    %v316 = vunpack.c.h.b16 %v50
    %v317 = vunpack.c.l.b16 %v51
    %v318 = vunpack.c.h.b16 %v51
    %v319 = vunpack.c.l.b16 %v52
    %v320 = vunpack.c.h.b16 %v52
    %v321 = vunpack.c.l.b16 %v53
    %v322 = vunpack.c.h.b16 %v53
    %v323 = vunpack.c.l.b16 %v54
    %v324 = vunpack.c.h.b16 %v54
    %v325 = vunpack.c.l.b16 %v55
    %v326 = vunpack.c.h.b16 %v55
    %v327 = vunpack.c.l.b16 %v56
    %v328 = vunpack.c.h.b16 %v56
    %v329 = vunpack.c.l.b16 %v57
    %v330 = vunpack.c.h.b16 %v57
    %v331 = vunpack.c.l.b16 %v58
    %v332 = vunpack.c.h.b16 %v58
    %v333 = vunpack.c.l.b16 %v59
    %v334 = vunpack.c.h.b16 %v59
    %v335 = vunpack.c.l.b16 %v60
    %v336 = vunpack.c.h.b16 %v60
    %v337 = vunpack.c.l.b16 %v61
    %v338 = vunpack.c.h.b16 %v61
    %v339 = vunpack.c.l.b16 %v62
    %v340 = vunpack.c.h.b16 %v62
    %v341 = vunpack.c.l.b16 %v63
    %v342 = vunpack.c.h.b16 %v63
    %v343 = vunpack.c.l.b16 %v64
    %v344 = vunpack.c.h.b16 %v64
    %v345 = vunpack.c.l.b16 %v65
    %v346 = vunpack.c.h.b16 %v65
    %v347 = vunpack.c.l.b16 %v66
    %v348 = vunpack.c.h.b16 %v66
    %v349 = vunpack.c.l.b16 %v67
    %v350 = vunpack.c.h.b16 %v67
    %v351 = vunpack.c.l.b16 %v68
    %v352 = vunpack.c.h.b16 %v68
    %v353 = vunpack.c.l.b16 %v69
    %v354 = vunpack.c.h.b16 %v69
    %v355 = vunpack.c.l.b16 %v70
    %v356 = vunpack.c.h.b16 %v70
    %v357 = vunpack.c.l.b16 %v71
    %v358 = vunpack.c.h.b16 %v71
    %v359 = vunpack.c.l.b16 %v72
    %v360 = vunpack.c.h.b16 %v72
    %v361 = vunpack.c.l.b16 %v73
    %v362 = vunpack.c.h.b16 %v73
    %v363 = vunpack.c.l.b16 %v74
    %v364 = vunpack.c.h.b16 %v74
    %v365 = vunpack.c.l.b16 %v75
    %v366 = vunpack.c.h.b16 %v75
    %v367 = vunpack.c.l.b16 %v76
    %v368 = vunpack.c.h.b16 %v76
    %v369 = vunpack.c.l.b16 %v77
    %v370 = vunpack.c.h.b16 %v77
    %v371 = vunpack.c.l.b16 %v78
    %v372 = vunpack.c.h.b16 %v78
    %v373 = vunpack.c.l.b16 %v79
    %v374 = vunpack.c.h.b16 %v79
    %v375 = vunpack.c.l.b16 %v80
    %v376 = vunpack.c.h.b16 %v80
    %v377 = vunpack.c.l.b16 %v81
    %v378 = vunpack.c.h.b16 %v81
    %v379 = vunpack.c.l.b16 %v82
    %v380 = vunpack.c.h.b16 %v82
    %v381 = vunpack.c.l.b16 %v83
    %v382 = vunpack.c.h.b16 %v83
    %v383 = vunpack.c.l.b16 %v84
    %v384 = vunpack.c.h.b16 %v84
    %v385 = vunpack.c.l.b16 %v85
    %v386 = vunpack.c.h.b16 %v85
    %v387 = vunpack.c.l.b16 %v86
    %v388 = vunpack.c.h.b16 %v86
    %v389 = vunpack.c.l.b16 %v87
    %v390 = vunpack.c.h.b16 %v87
    %v391 = vunpack.c.l.b16 %v88
    %v392 = vunpack.c.h.b16 %v88
    %v393 = vunpack.c.l.b16 %v89
    %v394 = vunpack.c.h.b16 %v89
    %v395 = vunpack.c.l.b16 %v90
    %v396 = vunpack.c.h.b16 %v90
    %v397 = vunpack.c.l.b16 %v91
    %v398 = vunpack.c.h.b16 %v91
    %v399 = vunpack.c.l.b16 %v92
    %v400 = vunpack.c.h.b16 %v92
    %v401 = vunpack.c.l.b16 %v93
    %v402 = vunpack.c.h.b16 %v93
    %v403 = vunpack.c.l.b16 %v94
    %v404 = vunpack.c.h.b16 %v94
    %v405 = vunpack.c.l.b16 %v95
    %v406 = vunpack.c.h.b16 %v95
    %v407 = vunpack.c.l.b16 %v96
    %v408 = vunpack.c.h.b16 %v96
    %v409 = vunpack.c.l.b16 %v97
    %v410 = vunpack.c.h.b16 %v97
    %v411 = vunpack.c.l.b16 %v98
    %v412 = vunpack.c.h.b16 %v98
    %v413 = vunpack.c.l.b16 %v99
    %v414 = vunpack.c.h.b16 %v99
    %v415 = vunpack.c.l.b16 %v100
    %v416 = vunpack.c.h.b16 %v100
    %v417 = vunpack.c.l.b16 %v101
    %v418 = vunpack.c.h.b16 %v101
    %v419 = vunpack.c.l.b16 %v102
    %v420 = vunpack.c.h.b16 %v102
    %v421 = vunpack.c.l.b16 %v103
    %v422 = vunpack.c.h.b16 %v103
    %v423 = vunpack.c.l.b16 %v104
    %v424 = vunpack.c.h.b16 %v104
    %v425 = vunpack.c.l.b16 %v105
    %v426 = vunpack.c.h.b16 %v105
    %v427 = vunpack.c.l.b16 %v106
    %v428 = vunpack.c.h.b16 %v106
    %v429 = vunpack.c.l.b16 %v107
    %v430 = vunpack.c.h.b16 %v107
    %v431 = vunpack.c.l.b16 %v108
    %v432 = vunpack.c.h.b16 %v108
    %v433 = vunpack.c.l.b16 %v109
    %v434 = vunpack.c.h.b16 %v109
    %v435 = vunpack.c.l.b16 %v110
    %v436 = vunpack.c.h.b16 %v110
    %v437 = vunpack.c.l.b16 %v111
    %v438 = vunpack.c.h.b16 %v111
    %v439 = vunpack.c.l.b16 %v112
    %v440 = vunpack.c.h.b16 %v112
    %v441 = vunpack.c.l.b16 %v113
    %v442 = vunpack.c.h.b16 %v113
    %v443 = vunpack.c.l.b16 %v114
    %v444 = vunpack.c.h.b16 %v114
    %v445 = vunpack.c.l.b16 %v115
    %v446 = vunpack.c.h.b16 %v115
    %v447 = vunpack.c.l.b16 %v116
    %v448 = vunpack.c.h.b16 %v116
    %v449 = vunpack.c.l.b16 %v117
    %v450 = vunpack.c.h.b16 %v117
    %v451 = vunpack.c.l.b16 %v118
    %v452 = vunpack.c.h.b16 %v118
    %v453 = vunpack.c.l.b16 %v119
    %v454 = vunpack.c.h.b16 %v119
    %v455 = vunpack.c.l.b16 %v120
    %v456 = vunpack.c.h.b16 %v120
    %v457 = vunpack.c.l.b16 %v121
    %v458 = vunpack.c.h.b16 %v121
    %v459 = vunpack.c.l.b16 %v122
    %v460 = vunpack.c.h.b16 %v122
    %v461 = vunpack.c.l.b16 %v123
    %v462 = vunpack.c.h.b16 %v123
    %v463 = vunpack.c.l.b16 %v124
    %v464 = vunpack.c.h.b16 %v124
    %v465 = vunpack.c.l.b16 %v125
    %v466 = vunpack.c.h.b16 %v125
    %v467 = vunpack.c.l.b16 %v126
    %v468 = vunpack.c.h.b16 %v126
    %v469 = vunpack.c.l.b16 %v127
    %v470 = vunpack.c.h.b16 %v127
    %v471 = vunpack.c.l.b16 %v128
    %v472 = vunpack.c.h.b16 %v128
    %v473 = vunpack.c.l.b16 %v129
    %v474 = vunpack.c.h.b16 %v129
    %v475 = vunpack.c.l.b16 %v130
    %v476 = vunpack.c.h.b16 %v130
    %v477 = vunpack.c.l.b16 %v131
    %v478 = vunpack.c.h.b16 %v131
    %v479 = vunpack.c.l.b16 %v132
    %v480 = vunpack.c.h.b16 %v132
    %v481 = vunpack.c.l.b16 %v133
    %v482 = vunpack.c.h.b16 %v133
    %v483 = vunpack.c.l.b16 %v134
    %v484 = vunpack.c.h.b16 %v134
    %v485 = vunpack.c.l.b16 %v135
    %v486 = vunpack.c.h.b16 %v135
    %v487 = vunpack.c.l.b16 %v136
    %v488 = vunpack.c.h.b16 %v136
    %v489 = vunpack.c.l.b16 %v137
    %v490 = vunpack.c.h.b16 %v137
    %v491 = vunpack.c.l.b16 %v138
    %v492 = vunpack.c.h.b16 %v138
    %v493 = vunpack.c.l.b16 %v139
    %v494 = vunpack.c.h.b16 %v139
    %v495 = vunpack.c.l.b16 %v140
    %v496 = vunpack.c.h.b16 %v140
    %v497 = vunpack.c.l.b16 %v141
    %v498 = vunpack.c.h.b16 %v141
    %v499 = vunpack.c.l.b16 %v142
    %v500 = vunpack.c.h.b16 %v142
    %v501 = vunpack.c.l.b16 %v143
    %v502 = vunpack.c.h.b16 %v143
    %v503 = vunpack.c.l.b16 %v144
    %v504 = vunpack.c.h.b16 %v144
    %v505 = vunpack.c.l.b16 %v145
    %v506 = vunpack.c.h.b16 %v145
    %v507 = vpack.c.b16 %v285, %v283
    %v508 = vpack.c.b16 %v286, %v284
    %v509 = vpack.c.b16 %v289, %v287
    %v510 = vpack.c.b16 %v290, %v288
    %v511 = vpack.c.b16 %v293, %v291
    %v512 = vpack.c.b16 %v294, %v292
    %v513 = vpack.c.b16 %v297, %v295
    %v514 = vpack.c.b16 %v298, %v296
    %v515 = vpack.c.b16 %v301, %v299
    %v516 = vpack.c.b16 %v302, %v300
    %v517 = vpack.c.b16 %v305, %v303
    %v518 = vpack.c.b16 %v306, %v304
    %v519 = vpack.c.b16 %v309, %v307
    %v520 = vpack.c.b16 %v310, %v308
    %v521 = vpack.c.b16 %v313, %v311
    %v522 = vpack.c.b16 %v314, %v312
    %v523 = vpack.c.b16 %v317, %v315
    %v524 = vpack.c.b16 %v318, %v316
    %v525 = vpack.c.b16 %v321, %v319
    %v526 = vpack.c.b16 %v322, %v320
    %v527 = vpack.c.b16 %v325, %v323
    %v528 = vpack.c.b16 %v326, %v324
    %v529 = vpack.c.b16 %v329, %v327
    %v530 = vpack.c.b16 %v330, %v328
    %v531 = vpack.c.b16 %v333, %v331
    %v532 = vpack.c.b16 %v334, %v332
    %v533 = vpack.c.b16 %v337, %v335
    %v534 = vpack.c.b16 %v338, %v336
    %v535 = vpack.c.b16 %v341, %v339
    %v536 = vpack.c.b16 %v342, %v340
    %v537 = vpack.c.b16 %v345, %v343
    %v538 = vpack.c.b16 %v346, %v344
    %v539 = vpack.c.b16 %v349, %v347
    %v540 = vpack.c.b16 %v350, %v348
    %v541 = vpack.c.b16 %v353, %v351
    %v542 = vpack.c.b16 %v354, %v352
    %v543 = vpack.c.b16 %v357, %v355
    %v544 = vpack.c.b16 %v358, %v356
    %v545 = vpack.c.b16 %v361, %v359
    %v546 = vpack.c.b16 %v362, %v360
    %v547 = vpack.c.b16 %v365, %v363
    %v548 = vpack.c.b16 %v366, %v364
    %v549 = vpack.c.b16 %v369, %v367
    %v550 = vpack.c.b16 %v370, %v368
    %v551 = vpack.c.b16 %v373, %v371
    %v552 = vpack.c.b16 %v374, %v372
    %v553 = vpack.c.b16 %v377, %v375
    %v554 = vpack.c.b16 %v378, %v376
    %v555 = vpack.c.b16 %v381, %v379
    %v556 = vpack.c.b16 %v382, %v380
    %v557 = vpack.c.b16 %v385, %v383
    %v558 = vpack.c.b16 %v386, %v384
    %v559 = vpack.c.b16 %v389, %v387
    %v560 = vpack.c.b16 %v390, %v388
    %v561 = vpack.c.b16 %v393, %v391
    %v562 = vpack.c.b16 %v394, %v392
    %v563 = vpack.c.b16 %v397, %v395
    %v564 = vpack.c.b16 %v398, %v396
    %v565 = vpack.c.b16 %v401, %v399
    %v566 = vpack.c.b16 %v402, %v400
    %v567 = vpack.c.b16 %v405, %v403
    %v568 = vpack.c.b16 %v406, %v404
    %v569 = vpack.c.b16 %v409, %v407
    %v570 = vpack.c.b16 %v410, %v408
    %v571 = vpack.c.b16 %v413, %v411
    %v572 = vpack.c.b16 %v414, %v412
    %v573 = vpack.c.b16 %v417, %v415
    %v574 = vpack.c.b16 %v418, %v416
    %v575 = vpack.c.b16 %v421, %v419
    %v576 = vpack.c.b16 %v422, %v420
    %v577 = vpack.c.b16 %v425, %v423
    %v578 = vpack.c.b16 %v426, %v424
    %v579 = vpack.c.b16 %v429, %v427
    %v580 = vpack.c.b16 %v430, %v428
    %v581 = vpack.c.b16 %v433, %v431
    %v582 = vpack.c.b16 %v434, %v432
    %v583 = vpack.c.b16 %v437, %v435
    %v584 = vpack.c.b16 %v438, %v436
    %v585 = vpack.c.b16 %v441, %v439
    %v586 = vpack.c.b16 %v442, %v440
    %v587 = vpack.c.b16 %v445, %v443
    %v588 = vpack.c.b16 %v446, %v444
    %v589 = vpack.c.b16 %v449, %v447
    %v590 = vpack.c.b16 %v450, %v448
    %v591 = vpack.c.b16 %v453, %v451
    %v592 = vpack.c.b16 %v454, %v452
    %v593 = vpack.c.b16 %v457, %v455
    %v594 = vpack.c.b16 %v458, %v456
    %v595 = vpack.c.b16 %v461, %v459
    %v596 = vpack.c.b16 %v462, %v460
    %v597 = vpack.c.b16 %v465, %v463
    %v598 = vpack.c.b16 %v466, %v464
    %v599 = vpack.c.b16 %v469, %v467
    %v600 = vpack.c.b16 %v470, %v468
    %v601 = vpack.c.b16 %v473, %v471
    %v602 = vpack.c.b16 %v474, %v472
    %v603 = vpack.c.b16 %v477, %v475
    %v604 = vpack.c.b16 %v478, %v476
    %v605 = vpack.c.b16 %v481, %v479
    %v606 = vpack.c.b16 %v482, %v480
    %v607 = vpack.c.b16 %v485, %v483
    %v608 = vpack.c.b16 %v486, %v484
    %v609 = vpack.c.b16 %v489, %v487
    %v610 = vpack.c.b16 %v490, %v488
    %v611 = vpack.c.b16 %v493, %v491
    %v612 = vpack.c.b16 %v494, %v492
    %v613 = vpack.c.b16 %v497, %v495
    %v614 = vpack.c.b16 %v498, %v496
    %v615 = vpack.c.b16 %v501, %v499
    %v616 = vpack.c.b16 %v502, %v500
    %v617 = vpack.c.b16 %v505, %v503
    %v618 = vpack.c.b16 %v506, %v504
    %731 = vmatprep.subr.bf16.mxu0 %v522
    %732 = vmatpush1.bf16.msra.mxu0 %v521
    %733 = vmatprep.subr.bf16.mxu0 %v520
    %734 = vmatpush1.bf16.msra.mxu0 %v519
    %735 = vmatprep.subr.bf16.mxu0 %v518
    %736 = vmatpush1.bf16.msra.mxu0 %v517
    %737 = vmatprep.subr.bf16.mxu0 %v516
    %738 = vmatpush1.bf16.msra.mxu0 %v515
    %739 = vmatprep.subr.bf16.mxu0 %v514
    %740 = vmatpush1.bf16.msra.mxu0 %v513
    %741 = vmatprep.subr.bf16.mxu0 %v512
    %742 = vmatpush1.bf16.msra.mxu0 %v511
    %743 = vmatprep.subr.bf16.mxu0 %v510
    %744 = vmatpush1.bf16.msra.mxu0 %v509
    %745 = vmatprep.subr.bf16.mxu0 %v508
    %746 = vmatpush1.bf16.msra.mxu0 %v507
    %747 = vmatprep.subr.bf16.mxu0 %v538
    %748 = vmatpush2.bf16.msra.mxu0 %v537
    %749 = vmatprep.subr.bf16.mxu0 %v536
    %750 = vmatpush2.bf16.msra.mxu0 %v535
    %751 = vmatprep.subr.bf16.mxu0 %v534
    %752 = vmatpush2.bf16.msra.mxu0 %v533
    %753 = vmatprep.subr.bf16.mxu0 %v532
    %754 = vmatpush2.bf16.msra.mxu0 %v531
    %755 = vmatprep.subr.bf16.mxu0 %v530
    %756 = vmatpush2.bf16.msra.mxu0 %v529
    %757 = vmatprep.subr.bf16.mxu0 %v528
    %758 = vmatpush2.bf16.msra.mxu0 %v527
    %759 = vmatprep.subr.bf16.mxu0 %v526
    %760 = vmatpush2.bf16.msra.mxu0 %v525
    %761 = vmatprep.subr.bf16.mxu0 %v524
    %762 = vmatpush2.bf16.msra.mxu0 %v523
    %763 = vmatprep.mubr.bf16.mxu0 %v158
    %764 = vmatmul.mubr.bf16.gmra.mxu0 %v157
    %v765 = vpop.f32.mrf.mxu0
    %v766 = vadd.f32 0.0, %v765
    %v767 = vpop.f32.mrf.mxu0
    %v768 = vadd.f32 0.0, %v767
    %v769 = vpop.f32.mrf.mxu0
    %v770 = vpop.f32.mrf.mxu0
    %771 = vdwg.mxu0
    %772 = vmatprep.subr.bf16.mxu0 %v554
    %773 = vmatpush1.bf16.msra.mxu0 %v553
    %774 = vmatprep.subr.bf16.mxu0 %v552
    %775 = vmatpush1.bf16.msra.mxu0 %v551
    %776 = vmatprep.subr.bf16.mxu0 %v550
    %777 = vmatpush1.bf16.msra.mxu0 %v549
    %778 = vmatprep.subr.bf16.mxu0 %v548
    %779 = vmatpush1.bf16.msra.mxu0 %v547
    %780 = vmatprep.subr.bf16.mxu0 %v546
    %781 = vmatpush1.bf16.msra.mxu0 %v545
    %782 = vmatprep.subr.bf16.mxu0 %v544
    %783 = vmatpush1.bf16.msra.mxu0 %v543
    %784 = vmatprep.subr.bf16.mxu0 %v542
    %785 = vmatpush1.bf16.msra.mxu0 %v541
    %786 = vmatprep.subr.bf16.mxu0 %v540
    %787 = vmatpush1.bf16.msra.mxu0 %v539
    %788 = vmatprep.subr.bf16.mxu0 %v570
    %789 = vmatpush2.bf16.msra.mxu0 %v569
    %790 = vmatprep.subr.bf16.mxu0 %v568
    %791 = vmatpush2.bf16.msra.mxu0 %v567
    %792 = vmatprep.subr.bf16.mxu0 %v566
    %793 = vmatpush2.bf16.msra.mxu0 %v565
    %794 = vmatprep.subr.bf16.mxu0 %v564
    %795 = vmatpush2.bf16.msra.mxu0 %v563
    %796 = vmatprep.subr.bf16.mxu0 %v562
    %797 = vmatpush2.bf16.msra.mxu0 %v561
    %798 = vmatprep.subr.bf16.mxu0 %v560
    %799 = vmatpush2.bf16.msra.mxu0 %v559
    %800 = vmatprep.subr.bf16.mxu0 %v558
    %801 = vmatpush2.bf16.msra.mxu0 %v557
    %802 = vmatprep.subr.bf16.mxu0 %v556
    %803 = vmatpush2.bf16.msra.mxu0 %v555
    %804 = vmatprep.mubr.bf16.mxu0 %v160
    %805 = vmatmul.mubr.bf16.gmra.mxu0 %v159
    %v806 = vpop.f32.mrf.mxu0
    %v807 = vadd.f32 %v766, %v806
    %v808 = vpop.f32.mrf.mxu0
    %v809 = vadd.f32 %v768, %v808
    %v810 = vpop.f32.mrf.mxu0
    %v811 = vpop.f32.mrf.mxu0
    %812 = vdwg.mxu0
    %813 = vmatprep.subr.bf16.mxu0 %v586
    %814 = vmatpush1.bf16.msra.mxu0 %v585
    %815 = vmatprep.subr.bf16.mxu0 %v584
    %816 = vmatpush1.bf16.msra.mxu0 %v583
    %817 = vmatprep.subr.bf16.mxu0 %v582
    %818 = vmatpush1.bf16.msra.mxu0 %v581
    %819 = vmatprep.subr.bf16.mxu0 %v580
    %820 = vmatpush1.bf16.msra.mxu0 %v579
    %821 = vmatprep.subr.bf16.mxu0 %v578
    %822 = vmatpush1.bf16.msra.mxu0 %v577
    %823 = vmatprep.subr.bf16.mxu0 %v576
    %824 = vmatpush1.bf16.msra.mxu0 %v575
    %825 = vmatprep.subr.bf16.mxu0 %v574
    %826 = vmatpush1.bf16.msra.mxu0 %v573
    %827 = vmatprep.subr.bf16.mxu0 %v572
    %828 = vmatpush1.bf16.msra.mxu0 %v571
    %829 = vmatprep.subr.bf16.mxu0 %v602
    %830 = vmatpush2.bf16.msra.mxu0 %v601
    %831 = vmatprep.subr.bf16.mxu0 %v600
    %832 = vmatpush2.bf16.msra.mxu0 %v599
    %833 = vmatprep.subr.bf16.mxu0 %v598
    %834 = vmatpush2.bf16.msra.mxu0 %v597
    %835 = vmatprep.subr.bf16.mxu0 %v596
    %836 = vmatpush2.bf16.msra.mxu0 %v595
    %837 = vmatprep.subr.bf16.mxu0 %v594
    %838 = vmatpush2.bf16.msra.mxu0 %v593
    %839 = vmatprep.subr.bf16.mxu0 %v592
    %840 = vmatpush2.bf16.msra.mxu0 %v591
    %841 = vmatprep.subr.bf16.mxu0 %v590
    %842 = vmatpush2.bf16.msra.mxu0 %v589
    %843 = vmatprep.subr.bf16.mxu0 %v588
    %844 = vmatpush2.bf16.msra.mxu0 %v587
    %845 = vmatprep.mubr.bf16.mxu0 %v162
    %846 = vmatmul.mubr.bf16.gmra.mxu0 %v161
    %v847 = vpop.f32.mrf.mxu0
    %v848 = vadd.f32 %v807, %v847
    %v849 = vpop.f32.mrf.mxu0
    %v850 = vadd.f32 %v809, %v849
    %v851 = vpop.f32.mrf.mxu0
    %v852 = vpop.f32.mrf.mxu0
    %853 = vdwg.mxu0
    %854 = vmatprep.subr.bf16.mxu0 %v618
    %855 = vmatpush1.bf16.msra.mxu0 %v617
    %856 = vmatprep.subr.bf16.mxu0 %v616
    %857 = vmatpush1.bf16.msra.mxu0 %v615
    %858 = vmatprep.subr.bf16.mxu0 %v614
    %859 = vmatpush1.bf16.msra.mxu0 %v613
    %860 = vmatprep.subr.bf16.mxu0 %v612
    %861 = vmatpush1.bf16.msra.mxu0 %v611
    %862 = vmatprep.subr.bf16.mxu0 %v610
    %863 = vmatpush1.bf16.msra.mxu0 %v609
    %864 = vmatprep.subr.bf16.mxu0 %v608
    %865 = vmatpush1.bf16.msra.mxu0 %v607
    %866 = vmatprep.subr.bf16.mxu0 %v606
    %867 = vmatpush1.bf16.msra.mxu0 %v605
    %868 = vmatprep.subr.bf16.mxu0 %v604
    %869 = vmatpush1.bf16.msra.mxu0 %v603
    %870 = vmatprep.subr.bf16.mxu0 0
    %871 = vmatpush2.bf16.msra.mxu0 0
    %872 = vmatprep.subr.bf16.mxu0 0
    %873 = vmatpush2.bf16.msra.mxu0 0
    %874 = vmatprep.subr.bf16.mxu0 0
    %875 = vmatpush2.bf16.msra.mxu0 0
    %876 = vmatprep.subr.bf16.mxu0 0
    %877 = vmatpush2.bf16.msra.mxu0 0
    %878 = vmatprep.subr.bf16.mxu0 0
    %879 = vmatpush2.bf16.msra.mxu0 0
    %880 = vmatprep.subr.bf16.mxu0 0
    %881 = vmatpush2.bf16.msra.mxu0 0
    %882 = vmatprep.subr.bf16.mxu0 0
    %883 = vmatpush2.bf16.msra.mxu0 0
    %884 = vmatprep.subr.bf16.mxu0 0
    %885 = vmatpush2.bf16.msra.mxu0 0
    %886 = vmatprep.mubr.bf16.mxu0 0
    %887 = vmatmul.mubr.bf16.gmra.mxu0 %v163
    %v888 = vpop.f32.mrf.mxu0
    %v889 = vadd.f32 %v848, %v888
    %v890 = vpop.f32.mrf.mxu0
    %v891 = vadd.f32 %v850, %v890
    %v892 = vpop.f32.mrf.mxu0
    %v893 = vpop.f32.mrf.mxu0
    %894 = vdwg.mxu0
    %v895 = vmax.f32 %v889, 0.0
    %v896 = vmax.f32 %v891, 0.0
    %v897 = vpack.c.bf16 %v895, %v895
    %v898 = vpack.c.bf16 %v896, %v896
    %v899 = vld [vmem:[%s2] sm:$0xf]
    %v900 = vld [vmem:[%s2 + $0x4] sm:$0xf]
    %v901 = vld [vmem:[%s2 + $0x8] sm:$0xf]
    %v902 = vld [vmem:[%s2 + $0xc] sm:$0xf]
    %v903 = vld [vmem:[%s2 + $0x10] sm:$0xf]
    %v904 = vld [vmem:[%s2 + $0x14] sm:$0xf]
    %v905 = vld [vmem:[%s2 + $0x18] sm:$0xf]
    %v906 = vld [vmem:[%s2 + $0x1c] sm:$0xf]
    %v907 = vld [vmem:[%s2 + $0x20] sm:$0xf]
    %v908 = vld [vmem:[%s2 + $0x24] sm:$0xf]
    %v909 = vld [vmem:[%s2 + $0x28] sm:$0xf]
    %v910 = vld [vmem:[%s2 + $0x2c] sm:$0xf]
    %v911 = vld [vmem:[%s2 + $0x30] sm:$0xf]
    %v912 = vld [vmem:[%s2 + $0x34] sm:$0xf]
    %v913 = vld [vmem:[%s2 + $0x38] sm:$0xf]
    %v914 = vld [vmem:[%s2 + $0x3c] sm:$0xf]
    %v915 = vld [vmem:[%s2 + $0x40] sm:$0xf]
    %v916 = vld [vmem:[%s2 + $0x44] sm:$0xf]
    %v917 = vld [vmem:[%s2 + $0x48] sm:$0xf]
    %v918 = vld [vmem:[%s2 + $0x4c] sm:$0xf]
    %v919 = vld [vmem:[%s2 + $0x50] sm:$0xf]
    %v920 = vld [vmem:[%s2 + $0x54] sm:$0xf]
    %v921 = vld [vmem:[%s2 + $0x58] sm:$0xf]
    %v922 = vld [vmem:[%s2 + $0x5c] sm:$0xf]
    %v923 = vld [vmem:[%s2 + $0x60] sm:$0xf]
    %v924 = vld [vmem:[%s2 + $0x64] sm:$0xf]
    %v925 = vld [vmem:[%s2 + $0x68] sm:$0xf]
    %v926 = vld [vmem:[%s2 + $0x6c] sm:$0xf]
    %v927 = vld [vmem:[%s2 + $0x70] sm:$0xf]
    %v928 = vld [vmem:[%s2 + $0x74] sm:$0xf]
    %v929 = vld [vmem:[%s2 + $0x78] sm:$0xf]
    %v930 = vld [vmem:[%s2 + $0x7c] sm:$0xf]
    %v963 = vunpack.c.l.b16 %v899
    %v964 = vunpack.c.l.b16 %v900
    %v965 = vunpack.c.l.b16 %v901
    %v966 = vunpack.c.l.b16 %v902
    %v967 = vunpack.c.l.b16 %v903
    %v968 = vunpack.c.l.b16 %v904
    %v969 = vunpack.c.l.b16 %v905
    %v970 = vunpack.c.l.b16 %v906
    %v971 = vunpack.c.l.b16 %v907
    %v972 = vunpack.c.l.b16 %v908
    %v973 = vunpack.c.l.b16 %v909
    %v974 = vunpack.c.l.b16 %v910
    %v975 = vunpack.c.l.b16 %v911
    %v976 = vunpack.c.l.b16 %v912
    %v977 = vunpack.c.l.b16 %v913
    %v978 = vunpack.c.l.b16 %v914
    %v979 = vunpack.c.l.b16 %v915
    %v980 = vunpack.c.l.b16 %v916
    %v981 = vunpack.c.l.b16 %v917
    %v982 = vunpack.c.l.b16 %v918
    %v983 = vunpack.c.l.b16 %v919
    %v984 = vunpack.c.l.b16 %v920
    %v985 = vunpack.c.l.b16 %v921
    %v986 = vunpack.c.l.b16 %v922
    %v987 = vunpack.c.l.b16 %v923
    %v988 = vunpack.c.l.b16 %v924
    %v989 = vunpack.c.l.b16 %v925
    %v990 = vunpack.c.l.b16 %v926
    %v991 = vunpack.c.l.b16 %v927
    %v992 = vunpack.c.l.b16 %v928
    %v993 = vunpack.c.l.b16 %v929
    %v994 = vunpack.c.l.b16 %v930
    %v995 = vpack.c.b16 %v964, %v963
    %v996 = vpack.c.b16 %v966, %v965
    %v997 = vpack.c.b16 %v968, %v967
    %v998 = vpack.c.b16 %v970, %v969
    %v999 = vpack.c.b16 %v972, %v971
    %v1000 = vpack.c.b16 %v974, %v973
    %v1001 = vpack.c.b16 %v976, %v975
    %v1002 = vpack.c.b16 %v978, %v977
    %v1003 = vpack.c.b16 %v980, %v979
    %v1004 = vpack.c.b16 %v982, %v981
    %v1005 = vpack.c.b16 %v984, %v983
    %v1006 = vpack.c.b16 %v986, %v985
    %v1007 = vpack.c.b16 %v988, %v987
    %v1008 = vpack.c.b16 %v990, %v989
    %v1009 = vpack.c.b16 %v992, %v991
    %v1010 = vpack.c.b16 %v994, %v993
    %1027 = vmatprep.subr.bf16.mxu0 0
    %1028 = vmatpush1.bf16.msra.mxu0 %v1002
    %1029 = vmatprep.subr.bf16.mxu0 0
    %1030 = vmatpush1.bf16.msra.mxu0 %v1001
    %1031 = vmatprep.subr.bf16.mxu0 0
    %1032 = vmatpush1.bf16.msra.mxu0 %v1000
    %1033 = vmatprep.subr.bf16.mxu0 0
    %1034 = vmatpush1.bf16.msra.mxu0 %v999
    %1035 = vmatprep.subr.bf16.mxu0 0
    %1036 = vmatpush1.bf16.msra.mxu0 %v998
    %1037 = vmatprep.subr.bf16.mxu0 0
    %1038 = vmatpush1.bf16.msra.mxu0 %v997
    %1039 = vmatprep.subr.bf16.mxu0 0
    %1040 = vmatpush1.bf16.msra.mxu0 %v996
    %1041 = vmatprep.subr.bf16.mxu0 0
    %1042 = vmatpush1.bf16.msra.mxu0 %v995
    %1043 = vmatprep.subr.bf16.mxu0 0
    %1044 = vmatpush2.bf16.msra.mxu0 %v1010
    %1045 = vmatprep.subr.bf16.mxu0 0
    %1046 = vmatpush2.bf16.msra.mxu0 %v1009
    %1047 = vmatprep.subr.bf16.mxu0 0
    %1048 = vmatpush2.bf16.msra.mxu0 %v1008
    %1049 = vmatprep.subr.bf16.mxu0 0
    %1050 = vmatpush2.bf16.msra.mxu0 %v1007
    %1051 = vmatprep.subr.bf16.mxu0 0
    %1052 = vmatpush2.bf16.msra.mxu0 %v1006
    %1053 = vmatprep.subr.bf16.mxu0 0
    %1054 = vmatpush2.bf16.msra.mxu0 %v1005
    %1055 = vmatprep.subr.bf16.mxu0 0
    %1056 = vmatpush2.bf16.msra.mxu0 %v1004
    %1057 = vmatprep.subr.bf16.mxu0 0
    %1058 = vmatpush2.bf16.msra.mxu0 %v1003
    %1059 = vmatprep.mubr.bf16.mxu0 %v898
    %1060 = vmatmul.mubr.bf16.gmra.mxu0 %v897
    %v1061 = vpop.f32.mrf.mxu0
    %v1062 = vadd.f32 0.0, %v1061
    %v1063 = vpop.f32.mrf.mxu0
    %v1064 = vpop.f32.mrf.mxu0
    %v1065 = vpop.f32.mrf.mxu0
    %1066 = vdwg.mxu0
    %vm1067 = vcmask 80896
    %1068 = vst.msk [vmem:[#allocation5] sm:$0xff] %vm1067, %v1062
    // Predicated region
    $region18: #{classifier_mnist_fc.1} parent=1 // pred_check
      _
    $region19: #{classifier_mnist_fc.1} parent=1 // pred_check_branch
      %1070 = sbr.rel (0) target = $region21
    $region20: #{classifier_mnist_fc.1} parent=1 // pred_region
      %s1072 = ssub.s32 128, 128
      %1073 = vsyncadd [#allocation4], %s1072
      %s1075 = sshll.u32 [#allocation5], 4
      %s1076 = int_to_ptr.vmem [resolvable:$true] %s1075
      %1078 = dma.vmem_to_hbm [thread:$0]  %s1076, 128, %s3, [#allocation4]
    $region21: #{classifier_mnist_fc.1} parent=1 // pred_fallthru
      _
    // Predicated region
    $region22: #{classifier_mnist_fc.1} parent=1 // pred_check
      _
    $region23: #{classifier_mnist_fc.1} parent=1 // pred_check_branch
      %1080 = sbr.rel (0) target = $region25
    $region24: #{classifier_mnist_fc.1} parent=1 // pred_region
      %1081 = dma.done [#allocation4], 128
    $region25: #{classifier_mnist_fc.1} parent=1 // pred_fallthru
      _
    %1082 = vsyncpa [#allocation3], 1
    %1083 = vsyncpa [#allocation4], 1

</llo_original>
